<compile_context>
chip_gen: v7x
topology: tpu7x:2x2x1
jax: 0.10.0
libtpu: 0.0.40
codegen_flags: <defaults>
</compile_context>

<pallas_src>
import jax
import jax.numpy as jnp
from jax.experimental import pallas as pl
from jax.experimental.pallas import tpu as pltpu


# ----------------------------------------------------------------------------
# Kernel: fused bidirectional GRU (both directions advance together).
# ----------------------------------------------------------------------------
def encoder_bigru_fused_kernel(xcat_ref, mask_ref,
                               w_in_ref, b_in_ref, w_hh_ref, b_hn_ref,
                               out_ref, hfin_ref):
    # xcat_ref : [S*B, 2E]  bf16   row i*B+b = [x[t=i, b] | x[t=S-1-i, b]]
    # mask_ref : [S, B, 2H] f32    step mask [valid(t=i) | valid(t=S-1-i)]
    # w_in_ref : [2E, 6H]   bf16   block input-projection weights
    # b_in_ref : [1, 6H]    f32    input bias (+ folded r/z hidden biases)
    # w_hh_ref : [2H, 6H]   bf16   block-diagonal recurrent weights
    # b_hn_ref : [1, 2H]    f32    n-gate hidden bias (fwd | bwd)
    # out_ref  : [S*B, 2H]  f32    per-step masked h_cat (raw step order)
    # hfin_ref : [B, 2H]    f32    final hidden state (fwd | bwd)
    S, B, H2 = mask_ref.shape
    H = H2 // 2

    # Hoisted input projection for BOTH directions: one MXU matmul.
    gi = (jnp.dot(xcat_ref[...], w_in_ref[...],
                  preferred_element_type=jnp.float32)
          + b_in_ref[...])                                   # [S*B, 6H] f32

    w_hh = w_hh_ref[...]
    b_hn = b_hn_ref[...]

    h = jnp.zeros((B, 2 * H), jnp.float32)                   # [fwd | bwd]
    rows = []
    # Fully unrolled (S is a small static constant): one fused recurrent
    # matmul per step drives both directions' gates.
    for i in range(S):
        gi_i = gi[i * B:(i + 1) * B, :]                      # [B, 6H] static slice
        gh = jnp.dot(h.astype(jnp.bfloat16), w_hh,
                     preferred_element_type=jnp.float32)     # [B, 6H]
        r = jax.nn.sigmoid(gi_i[:, 0:2 * H] + gh[:, 0:2 * H])
        z = jax.nn.sigmoid(gi_i[:, 2 * H:4 * H] + gh[:, 2 * H:4 * H])
        n = jnp.tanh(gi_i[:, 4 * H:6 * H] + r * (gh[:, 4 * H:6 * H] + b_hn))
        h_new = (1.0 - z) * n + z * h
        m = mask_ref[i]                                      # [B, 2H]
        h = m * h_new + (1.0 - m) * h                        # freeze past length
        rows.append(m * h)                                   # zero padded outputs

    out_ref[...] = jnp.concatenate(rows, axis=0)             # one batched store
    hfin_ref[...] = h


# ----------------------------------------------------------------------------
# Parameters (deterministic synthetic init; per-direction [in, out] weights,
# PyTorch GRU gate order r, z, n).
# ----------------------------------------------------------------------------
def init_encoder_params(key, emb_size, hidden_size):
    E, H = emb_size, hidden_size
    ks = jax.random.split(key, 8)

    def w(k, shape, scale=0.1):
        return (scale * jax.random.normal(k, shape)).astype(jnp.float32)

    return {
        'wif': w(ks[0], (E, 3 * H)), 'whf': w(ks[1], (H, 3 * H)),
        'bif': w(ks[2], (1, 3 * H)), 'bhf': w(ks[3], (1, 3 * H)),
        'wib': w(ks[4], (E, 3 * H)), 'whb': w(ks[5], (H, 3 * H)),
        'bib': w(ks[6], (1, 3 * H)), 'bhb': w(ks[7], (1, 3 * H)),
    }


def pack_encoder_params(params):
    """Pack per-direction GRU weights into the fused block layout (done once).

    Column order of the packed 6H axis: [r_f, r_b, z_f, z_b, n_f, n_b].
    """
    E = params['wif'].shape[0]
    H = params['whf'].shape[0]

    def gate(w, g):                     # [in, 3H] -> gate columns [in, H]
        return w[:, g * H:(g + 1) * H]

    z_eh = jnp.zeros((E, H), jnp.float32)
    z_hh = jnp.zeros((H, H), jnp.float32)

    w_in_top = jnp.concatenate([gate(params['wif'], 0), z_eh,
                                gate(params['wif'], 1), z_eh,
                                gate(params['wif'], 2), z_eh], axis=1)
    w_in_bot = jnp.concatenate([z_eh, gate(params['wib'], 0),
                                z_eh, gate(params['wib'], 1),
                                z_eh, gate(params['wib'], 2)], axis=1)
    w_in = jnp.concatenate([w_in_top, w_in_bot], axis=0)      # [2E, 6H]

    w_hh_top = jnp.concatenate([gate(params['whf'], 0), z_hh,
                                gate(params['whf'], 1), z_hh,
                                gate(params['whf'], 2), z_hh], axis=1)
    w_hh_bot = jnp.concatenate([z_hh, gate(params['whb'], 0),
                                z_hh, gate(params['whb'], 1),
                                z_hh, gate(params['whb'], 2)], axis=1)
    w_hh = jnp.concatenate([w_hh_top, w_hh_bot], axis=0)      # [2H, 6H]

    bif, bhf = params['bif'], params['bhf']
    bib, bhb = params['bib'], params['bhb']
    # Fold r/z hidden biases into the input bias; n hidden bias stays separate.
    b_in = jnp.concatenate([
        bif[:, 0:H] + bhf[:, 0:H],         bib[:, 0:H] + bhb[:, 0:H],
        bif[:, H:2 * H] + bhf[:, H:2 * H], bib[:, H:2 * H] + bhb[:, H:2 * H],
        bif[:, 2 * H:3 * H],               bib[:, 2 * H:3 * H]], axis=1)
    b_hn = jnp.concatenate([bhf[:, 2 * H:3 * H], bhb[:, 2 * H:3 * H]], axis=1)

    return {
        'w_in': w_in.astype(jnp.bfloat16),
        'w_hh': w_hh.astype(jnp.bfloat16),
        'b_in': b_in.astype(jnp.float32),
        'b_hn': b_hn.astype(jnp.float32),
    }


# ----------------------------------------------------------------------------
# Encoder.forward(x, mask, lengths) -> (output, final)
# ----------------------------------------------------------------------------
def encoder_forward(packed, x, mask, lengths):
    """x: [B, S, E] embeddings; lengths: [B] ints (packed-sequence semantics).

    Returns (output [B, S, 2H], final [num_layers=1, B, 2H]) exactly like the
    PyTorch Encoder: final = cat([fwd_final, bwd_final], dim=2).
    `mask` is accepted for signature parity but unused (as in the reference).
    """
    del mask
    B, S, E = x.shape
    H = packed['w_hh'].shape[0] // 2

    # Time-major fwd stream and its time-reversed copy (bwd stream), fused on
    # the feature axis so one matmul projects both directions.
    x_f = jnp.transpose(x, (1, 0, 2)).astype(jnp.float32)            # [S, B, E]
    x_b = x_f[::-1]                                                  # [S, B, E]
    x_cat = jnp.concatenate([x_f, x_b], axis=-1)                     # [S, B, 2E]
    x_cat = x_cat.reshape(S * B, 2 * E).astype(jnp.bfloat16)

    valid = (jnp.arange(S, dtype=jnp.int32)[:, None]
             < lengths.astype(jnp.int32)[None, :]).astype(jnp.float32)  # [S, B]
    m_f = jnp.broadcast_to(valid[:, :, None], (S, B, H))
    m_b = jnp.broadcast_to(valid[::-1][:, :, None], (S, B, H))
    mask_cat = jnp.concatenate([m_f, m_b], axis=-1)                  # [S, B, 2H]

    vmem = pl.BlockSpec(memory_space=pltpu.MemorySpace.VMEM)
    out_raw, h_final = pl.pallas_call(
        encoder_bigru_fused_kernel,
        out_shape=(jax.ShapeDtypeStruct((S * B, 2 * H), jnp.float32),
                   jax.ShapeDtypeStruct((B, 2 * H), jnp.float32)),
        in_specs=[vmem] * 6,
        out_specs=(vmem, vmem),
    )(x_cat, mask_cat, packed['w_in'], packed['b_in'],
      packed['w_hh'], packed['b_hn'])

    # Wrapper-side layout plumbing: un-flip the backward half in time,
    # concatenate per-direction halves, back to batch-major.
    out_raw = out_raw.reshape(S, B, 2 * H)
    out_fwd = out_raw[:, :, :H]            # fwd output at time t
    out_bwd = out_raw[::-1, :, H:]         # undo the backward time reversal
    output = jnp.concatenate([out_fwd, out_bwd], axis=-1)            # [S, B, 2H]
    output = jnp.transpose(output, (1, 0, 2))                        # [B, S, 2H]
    final = h_final[None]                                            # [1, B, 2H]
    return output, final


# ----------------------------------------------------------------------------
# Pure-JAX f32 reference (same masked-GRU semantics) for correctness check.
# ----------------------------------------------------------------------------
def _reference_encoder(params, x, lengths):
    B, S, _E = x.shape
    H = params['whf'].shape[0]

    def step(x_t, h, wi, wh, bi, bh):
        gi = x_t @ wi + bi
        gh = h @ wh + bh
        r = jax.nn.sigmoid(gi[:, :H] + gh[:, :H])
        z = jax.nn.sigmoid(gi[:, H:2 * H] + gh[:, H:2 * H])
        n = jnp.tanh(gi[:, 2 * H:] + r * gh[:, 2 * H:])
        return (1.0 - z) * n + z * h

    valid = (jnp.arange(S)[None, :] < lengths[:, None]).astype(jnp.float32)

    out_f, h = [], jnp.zeros((B, H), jnp.float32)
    for t in range(S):
        m = valid[:, t:t + 1]
        h = m * step(x[:, t], h, params['wif'], params['whf'],
                     params['bif'], params['bhf']) + (1.0 - m) * h
        out_f.append(m * h)
    hf = h

    out_b, h = [None] * S, jnp.zeros((B, H), jnp.float32)
    for t in range(S - 1, -1, -1):
        m = valid[:, t:t + 1]
        h = m * step(x[:, t], h, params['wib'], params['whb'],
                     params['bib'], params['bhb']) + (1.0 - m) * h
        out_b[t] = m * h
    hb = h

    output = jnp.concatenate(
        [jnp.stack(out_f, axis=1), jnp.stack(out_b, axis=1)], axis=-1)
    final = jnp.concatenate([hf, hb], axis=-1)[None]
    return output, final


if __name__ == "__main__":
    key = jax.random.PRNGKey(0)
    B, S, E, H = 2, 8, 32, 32

    kp, kx = jax.random.split(key, 2)
    params = init_encoder_params(kp, E, H)
    packed = pack_encoder_params(params)

    x = jax.random.normal(kx, (B, S, E), dtype=jnp.float32)     # embeddings
    lengths = jnp.array([S, S - 2], dtype=jnp.int32)            # sorted desc.
    src_mask = (jnp.arange(S)[None, None, :]
                < lengths[:, None, None]).astype(jnp.float32)   # [B, 1, S]

    fwd = jax.jit(encoder_forward)
    output, final = fwd(packed, x, src_mask, lengths)
    jax.block_until_ready((output, final))

    assert output.shape == (B, S, 2 * H)
    assert final.shape == (1, B, 2 * H)

    # Kernel uses bf16 MXU operands (f32 accumulate / gate math); compare to
    # the pure-f32 reference with a tolerance covering bf16 operand rounding.
    ref_out, ref_final = _reference_encoder(params, x, lengths)
    assert jnp.allclose(output, ref_out, atol=2e-2, rtol=2e-2)
    assert jnp.allclose(final, ref_final, atol=2e-2, rtol=2e-2)

    print("KERNEL_OK")
</pallas_src>

<mosaic_0001>
module attributes {stable_mosaic.version = 11 : i64} {
  func.func @encoder_bigru_fused_kernel(%arg0: memref<16x64xbf16, #tpu.memory_space<vmem>>, %arg1: memref<8x2x64xf32, #tpu.memory_space<vmem>>, %arg2: memref<64x192xbf16, #tpu.memory_space<vmem>>, %arg3: memref<1x192xf32, #tpu.memory_space<vmem>>, %arg4: memref<64x192xbf16, #tpu.memory_space<vmem>>, %arg5: memref<1x64xf32, #tpu.memory_space<vmem>>, %arg6: memref<16x64xf32, #tpu.memory_space<vmem>>, %arg7: memref<2x64xf32, #tpu.memory_space<vmem>>) attributes {dimension_semantics = [], scalar_prefetch = 0 : i64, scratch_operands = 0 : i64, tpu.core_type = #tpu.core_type<tc>} {
    %c0 = arith.constant 0 : index
    %c0_0 = arith.constant 0 : index
    %0 = vector.load %arg0[%c0, %c0_0] : memref<16x64xbf16, #tpu.memory_space<vmem>>, vector<16x64xbf16>
    %c0_1 = arith.constant 0 : index
    %c0_2 = arith.constant 0 : index
    %1 = vector.load %arg2[%c0_1, %c0_2] : memref<64x192xbf16, #tpu.memory_space<vmem>>, vector<64x192xbf16>
    %cst = arith.constant dense<0.000000e+00> : vector<16x192xf32>
    %2 = tpu.matmul %0, %1, %cst {dimension_numbers = #tpu.dot_dimension_numbers<[1], [0], [0], [1], [0, 0, 1, 1], [], []>} : vector<16x64xbf16>, vector<64x192xbf16>, vector<16x192xf32> -> vector<16x192xf32>
    %c0_3 = arith.constant 0 : index
    %c0_4 = arith.constant 0 : index
    %3 = vector.load %arg3[%c0_3, %c0_4] : memref<1x192xf32, #tpu.memory_space<vmem>>, vector<1x192xf32>
    %4 = vector.broadcast %3 : vector<1x192xf32> to vector<16x192xf32>
    %5 = arith.addf %2, %4 : vector<16x192xf32>
    %c0_5 = arith.constant 0 : index
    %c0_6 = arith.constant 0 : index
    %6 = vector.load %arg4[%c0_5, %c0_6] : memref<64x192xbf16, #tpu.memory_space<vmem>>, vector<64x192xbf16>
    %c0_7 = arith.constant 0 : index
    %c0_8 = arith.constant 0 : index
    %7 = vector.load %arg5[%c0_7, %c0_8] : memref<1x64xf32, #tpu.memory_space<vmem>>, vector<1x64xf32>
    %cst_9 = arith.constant 0.000000e+00 : f32
    %8 = vector.broadcast %cst_9 : f32 to vector<2x64xf32>
    %9 = vector.extract_strided_slice %5 {offsets = [0, 0], sizes = [2, 192], strides = [1, 1]} : vector<16x192xf32> to vector<2x192xf32>
    %10 = arith.truncf %8 : vector<2x64xf32> to vector<2x64xbf16>
    %cst_10 = arith.constant dense<0.000000e+00> : vector<2x192xf32>
    %11 = tpu.matmul %10, %6, %cst_10 {dimension_numbers = #tpu.dot_dimension_numbers<[1], [0], [0], [1], [0, 0, 1, 1], [], []>} : vector<2x64xbf16>, vector<64x192xbf16>, vector<2x192xf32> -> vector<2x192xf32>
    %12 = vector.extract_strided_slice %9 {offsets = [0, 0], sizes = [2, 64], strides = [1, 1]} : vector<2x192xf32> to vector<2x64xf32>
    %13 = vector.extract_strided_slice %11 {offsets = [0, 0], sizes = [2, 64], strides = [1, 1]} : vector<2x192xf32> to vector<2x64xf32>
    %14 = arith.addf %12, %13 : vector<2x64xf32>
    %15 = arith.negf %14 : vector<2x64xf32>
    %16 = math.exp %15 : vector<2x64xf32>
    %cst_11 = arith.constant 1.000000e+00 : f32
    %17 = vector.broadcast %cst_11 : f32 to vector<2x64xf32>
    %18 = arith.addf %17, %16 : vector<2x64xf32>
    %19 = arith.divf %17, %18 : vector<2x64xf32>
    %20 = vector.extract_strided_slice %9 {offsets = [0, 64], sizes = [2, 64], strides = [1, 1]} : vector<2x192xf32> to vector<2x64xf32>
    %21 = vector.extract_strided_slice %11 {offsets = [0, 64], sizes = [2, 64], strides = [1, 1]} : vector<2x192xf32> to vector<2x64xf32>
    %22 = arith.addf %20, %21 : vector<2x64xf32>
    %23 = arith.negf %22 : vector<2x64xf32>
    %24 = math.exp %23 : vector<2x64xf32>
    %cst_12 = arith.constant 1.000000e+00 : f32
    %25 = vector.broadcast %cst_12 : f32 to vector<2x64xf32>
    %26 = arith.addf %25, %24 : vector<2x64xf32>
    %27 = arith.divf %25, %26 : vector<2x64xf32>
    %28 = vector.extract_strided_slice %9 {offsets = [0, 128], sizes = [2, 64], strides = [1, 1]} : vector<2x192xf32> to vector<2x64xf32>
    %29 = vector.extract_strided_slice %11 {offsets = [0, 128], sizes = [2, 64], strides = [1, 1]} : vector<2x192xf32> to vector<2x64xf32>
    %30 = vector.broadcast %7 : vector<1x64xf32> to vector<2x64xf32>
    %31 = arith.addf %29, %30 : vector<2x64xf32>
    %32 = arith.mulf %19, %31 : vector<2x64xf32>
    %33 = arith.addf %28, %32 : vector<2x64xf32>
    %34 = math.tanh %33 : vector<2x64xf32>
    %cst_13 = arith.constant 1.000000e+00 : f32
    %35 = vector.broadcast %cst_13 : f32 to vector<2x64xf32>
    %36 = arith.subf %35, %27 : vector<2x64xf32>
    %37 = arith.mulf %36, %34 : vector<2x64xf32>
    %38 = arith.mulf %27, %8 : vector<2x64xf32>
    %39 = arith.addf %37, %38 : vector<2x64xf32>
    %c0_14 = arith.constant 0 : index
    %c0_15 = arith.constant 0 : index
    %c0_16 = arith.constant 0 : index
    %40 = vector.load %arg1[%c0_14, %c0_15, %c0_16] : memref<8x2x64xf32, #tpu.memory_space<vmem>>, vector<1x2x64xf32>
    %41 = vector.shape_cast %40 : vector<1x2x64xf32> to vector<2x64xf32>
    %42 = arith.mulf %41, %39 : vector<2x64xf32>
    %cst_17 = arith.constant 1.000000e+00 : f32
    %43 = vector.broadcast %cst_17 : f32 to vector<2x64xf32>
    %44 = arith.subf %43, %41 : vector<2x64xf32>
    %45 = arith.mulf %44, %8 : vector<2x64xf32>
    %46 = arith.addf %42, %45 : vector<2x64xf32>
    %47 = arith.mulf %41, %46 : vector<2x64xf32>
    %48 = vector.extract_strided_slice %5 {offsets = [2, 0], sizes = [2, 192], strides = [1, 1]} : vector<16x192xf32> to vector<2x192xf32>
    %49 = arith.truncf %46 : vector<2x64xf32> to vector<2x64xbf16>
    %cst_18 = arith.constant dense<0.000000e+00> : vector<2x192xf32>
    %50 = tpu.matmul %49, %6, %cst_18 {dimension_numbers = #tpu.dot_dimension_numbers<[1], [0], [0], [1], [0, 0, 1, 1], [], []>} : vector<2x64xbf16>, vector<64x192xbf16>, vector<2x192xf32> -> vector<2x192xf32>
    %51 = vector.extract_strided_slice %48 {offsets = [0, 0], sizes = [2, 64], strides = [1, 1]} : vector<2x192xf32> to vector<2x64xf32>
    %52 = vector.extract_strided_slice %50 {offsets = [0, 0], sizes = [2, 64], strides = [1, 1]} : vector<2x192xf32> to vector<2x64xf32>
    %53 = arith.addf %51, %52 : vector<2x64xf32>
    %54 = arith.negf %53 : vector<2x64xf32>
    %55 = math.exp %54 : vector<2x64xf32>
    %cst_19 = arith.constant 1.000000e+00 : f32
    %56 = vector.broadcast %cst_19 : f32 to vector<2x64xf32>
    %57 = arith.addf %56, %55 : vector<2x64xf32>
    %58 = arith.divf %56, %57 : vector<2x64xf32>
    %59 = vector.extract_strided_slice %48 {offsets = [0, 64], sizes = [2, 64], strides = [1, 1]} : vector<2x192xf32> to vector<2x64xf32>
    %60 = vector.extract_strided_slice %50 {offsets = [0, 64], sizes = [2, 64], strides = [1, 1]} : vector<2x192xf32> to vector<2x64xf32>
    %61 = arith.addf %59, %60 : vector<2x64xf32>
    %62 = arith.negf %61 : vector<2x64xf32>
    %63 = math.exp %62 : vector<2x64xf32>
    %cst_20 = arith.constant 1.000000e+00 : f32
    %64 = vector.broadcast %cst_20 : f32 to vector<2x64xf32>
    %65 = arith.addf %64, %63 : vector<2x64xf32>
    %66 = arith.divf %64, %65 : vector<2x64xf32>
    %67 = vector.extract_strided_slice %48 {offsets = [0, 128], sizes = [2, 64], strides = [1, 1]} : vector<2x192xf32> to vector<2x64xf32>
    %68 = vector.extract_strided_slice %50 {offsets = [0, 128], sizes = [2, 64], strides = [1, 1]} : vector<2x192xf32> to vector<2x64xf32>
    %69 = vector.broadcast %7 : vector<1x64xf32> to vector<2x64xf32>
    %70 = arith.addf %68, %69 : vector<2x64xf32>
    %71 = arith.mulf %58, %70 : vector<2x64xf32>
    %72 = arith.addf %67, %71 : vector<2x64xf32>
    %73 = math.tanh %72 : vector<2x64xf32>
    %cst_21 = arith.constant 1.000000e+00 : f32
    %74 = vector.broadcast %cst_21 : f32 to vector<2x64xf32>
    %75 = arith.subf %74, %66 : vector<2x64xf32>
    %76 = arith.mulf %75, %73 : vector<2x64xf32>
    %77 = arith.mulf %66, %46 : vector<2x64xf32>
    %78 = arith.addf %76, %77 : vector<2x64xf32>
    %c1 = arith.constant 1 : index
    %c0_22 = arith.constant 0 : index
    %c0_23 = arith.constant 0 : index
    %79 = vector.load %arg1[%c1, %c0_22, %c0_23] : memref<8x2x64xf32, #tpu.memory_space<vmem>>, vector<1x2x64xf32>
    %80 = vector.shape_cast %79 : vector<1x2x64xf32> to vector<2x64xf32>
    %81 = arith.mulf %80, %78 : vector<2x64xf32>
    %cst_24 = arith.constant 1.000000e+00 : f32
    %82 = vector.broadcast %cst_24 : f32 to vector<2x64xf32>
    %83 = arith.subf %82, %80 : vector<2x64xf32>
    %84 = arith.mulf %83, %46 : vector<2x64xf32>
    %85 = arith.addf %81, %84 : vector<2x64xf32>
    %86 = arith.mulf %80, %85 : vector<2x64xf32>
    %87 = vector.extract_strided_slice %5 {offsets = [4, 0], sizes = [2, 192], strides = [1, 1]} : vector<16x192xf32> to vector<2x192xf32>
    %88 = arith.truncf %85 : vector<2x64xf32> to vector<2x64xbf16>
    %cst_25 = arith.constant dense<0.000000e+00> : vector<2x192xf32>
    %89 = tpu.matmul %88, %6, %cst_25 {dimension_numbers = #tpu.dot_dimension_numbers<[1], [0], [0], [1], [0, 0, 1, 1], [], []>} : vector<2x64xbf16>, vector<64x192xbf16>, vector<2x192xf32> -> vector<2x192xf32>
    %90 = vector.extract_strided_slice %87 {offsets = [0, 0], sizes = [2, 64], strides = [1, 1]} : vector<2x192xf32> to vector<2x64xf32>
    %91 = vector.extract_strided_slice %89 {offsets = [0, 0], sizes = [2, 64], strides = [1, 1]} : vector<2x192xf32> to vector<2x64xf32>
    %92 = arith.addf %90, %91 : vector<2x64xf32>
    %93 = arith.negf %92 : vector<2x64xf32>
    %94 = math.exp %93 : vector<2x64xf32>
    %cst_26 = arith.constant 1.000000e+00 : f32
    %95 = vector.broadcast %cst_26 : f32 to vector<2x64xf32>
    %96 = arith.addf %95, %94 : vector<2x64xf32>
    %97 = arith.divf %95, %96 : vector<2x64xf32>
    %98 = vector.extract_strided_slice %87 {offsets = [0, 64], sizes = [2, 64], strides = [1, 1]} : vector<2x192xf32> to vector<2x64xf32>
    %99 = vector.extract_strided_slice %89 {offsets = [0, 64], sizes = [2, 64], strides = [1, 1]} : vector<2x192xf32> to vector<2x64xf32>
    %100 = arith.addf %98, %99 : vector<2x64xf32>
    %101 = arith.negf %100 : vector<2x64xf32>
    %102 = math.exp %101 : vector<2x64xf32>
    %cst_27 = arith.constant 1.000000e+00 : f32
    %103 = vector.broadcast %cst_27 : f32 to vector<2x64xf32>
    %104 = arith.addf %103, %102 : vector<2x64xf32>
    %105 = arith.divf %103, %104 : vector<2x64xf32>
    %106 = vector.extract_strided_slice %87 {offsets = [0, 128], sizes = [2, 64], strides = [1, 1]} : vector<2x192xf32> to vector<2x64xf32>
    %107 = vector.extract_strided_slice %89 {offsets = [0, 128], sizes = [2, 64], strides = [1, 1]} : vector<2x192xf32> to vector<2x64xf32>
    %108 = vector.broadcast %7 : vector<1x64xf32> to vector<2x64xf32>
    %109 = arith.addf %107, %108 : vector<2x64xf32>
    %110 = arith.mulf %97, %109 : vector<2x64xf32>
    %111 = arith.addf %106, %110 : vector<2x64xf32>
    %112 = math.tanh %111 : vector<2x64xf32>
    %cst_28 = arith.constant 1.000000e+00 : f32
    %113 = vector.broadcast %cst_28 : f32 to vector<2x64xf32>
    %114 = arith.subf %113, %105 : vector<2x64xf32>
    %115 = arith.mulf %114, %112 : vector<2x64xf32>
    %116 = arith.mulf %105, %85 : vector<2x64xf32>
    %117 = arith.addf %115, %116 : vector<2x64xf32>
    %c2 = arith.constant 2 : index
    %c0_29 = arith.constant 0 : index
    %c0_30 = arith.constant 0 : index
    %118 = vector.load %arg1[%c2, %c0_29, %c0_30] : memref<8x2x64xf32, #tpu.memory_space<vmem>>, vector<1x2x64xf32>
    %119 = vector.shape_cast %118 : vector<1x2x64xf32> to vector<2x64xf32>
    %120 = arith.mulf %119, %117 : vector<2x64xf32>
    %cst_31 = arith.constant 1.000000e+00 : f32
    %121 = vector.broadcast %cst_31 : f32 to vector<2x64xf32>
    %122 = arith.subf %121, %119 : vector<2x64xf32>
    %123 = arith.mulf %122, %85 : vector<2x64xf32>
    %124 = arith.addf %120, %123 : vector<2x64xf32>
    %125 = arith.mulf %119, %124 : vector<2x64xf32>
    %126 = vector.extract_strided_slice %5 {offsets = [6, 0], sizes = [2, 192], strides = [1, 1]} : vector<16x192xf32> to vector<2x192xf32>
    %127 = arith.truncf %124 : vector<2x64xf32> to vector<2x64xbf16>
    %cst_32 = arith.constant dense<0.000000e+00> : vector<2x192xf32>
    %128 = tpu.matmul %127, %6, %cst_32 {dimension_numbers = #tpu.dot_dimension_numbers<[1], [0], [0], [1], [0, 0, 1, 1], [], []>} : vector<2x64xbf16>, vector<64x192xbf16>, vector<2x192xf32> -> vector<2x192xf32>
    %129 = vector.extract_strided_slice %126 {offsets = [0, 0], sizes = [2, 64], strides = [1, 1]} : vector<2x192xf32> to vector<2x64xf32>
    %130 = vector.extract_strided_slice %128 {offsets = [0, 0], sizes = [2, 64], strides = [1, 1]} : vector<2x192xf32> to vector<2x64xf32>
    %131 = arith.addf %129, %130 : vector<2x64xf32>
    %132 = arith.negf %131 : vector<2x64xf32>
    %133 = math.exp %132 : vector<2x64xf32>
    %cst_33 = arith.constant 1.000000e+00 : f32
    %134 = vector.broadcast %cst_33 : f32 to vector<2x64xf32>
    %135 = arith.addf %134, %133 : vector<2x64xf32>
    %136 = arith.divf %134, %135 : vector<2x64xf32>
    %137 = vector.extract_strided_slice %126 {offsets = [0, 64], sizes = [2, 64], strides = [1, 1]} : vector<2x192xf32> to vector<2x64xf32>
    %138 = vector.extract_strided_slice %128 {offsets = [0, 64], sizes = [2, 64], strides = [1, 1]} : vector<2x192xf32> to vector<2x64xf32>
    %139 = arith.addf %137, %138 : vector<2x64xf32>
    %140 = arith.negf %139 : vector<2x64xf32>
    %141 = math.exp %140 : vector<2x64xf32>
    %cst_34 = arith.constant 1.000000e+00 : f32
    %142 = vector.broadcast %cst_34 : f32 to vector<2x64xf32>
    %143 = arith.addf %142, %141 : vector<2x64xf32>
    %144 = arith.divf %142, %143 : vector<2x64xf32>
    %145 = vector.extract_strided_slice %126 {offsets = [0, 128], sizes = [2, 64], strides = [1, 1]} : vector<2x192xf32> to vector<2x64xf32>
    %146 = vector.extract_strided_slice %128 {offsets = [0, 128], sizes = [2, 64], strides = [1, 1]} : vector<2x192xf32> to vector<2x64xf32>
    %147 = vector.broadcast %7 : vector<1x64xf32> to vector<2x64xf32>
    %148 = arith.addf %146, %147 : vector<2x64xf32>
    %149 = arith.mulf %136, %148 : vector<2x64xf32>
    %150 = arith.addf %145, %149 : vector<2x64xf32>
    %151 = math.tanh %150 : vector<2x64xf32>
    %cst_35 = arith.constant 1.000000e+00 : f32
    %152 = vector.broadcast %cst_35 : f32 to vector<2x64xf32>
    %153 = arith.subf %152, %144 : vector<2x64xf32>
    %154 = arith.mulf %153, %151 : vector<2x64xf32>
    %155 = arith.mulf %144, %124 : vector<2x64xf32>
    %156 = arith.addf %154, %155 : vector<2x64xf32>
    %c3 = arith.constant 3 : index
    %c0_36 = arith.constant 0 : index
    %c0_37 = arith.constant 0 : index
    %157 = vector.load %arg1[%c3, %c0_36, %c0_37] : memref<8x2x64xf32, #tpu.memory_space<vmem>>, vector<1x2x64xf32>
    %158 = vector.shape_cast %157 : vector<1x2x64xf32> to vector<2x64xf32>
    %159 = arith.mulf %158, %156 : vector<2x64xf32>
    %cst_38 = arith.constant 1.000000e+00 : f32
    %160 = vector.broadcast %cst_38 : f32 to vector<2x64xf32>
    %161 = arith.subf %160, %158 : vector<2x64xf32>
    %162 = arith.mulf %161, %124 : vector<2x64xf32>
    %163 = arith.addf %159, %162 : vector<2x64xf32>
    %164 = arith.mulf %158, %163 : vector<2x64xf32>
    %165 = vector.extract_strided_slice %5 {offsets = [8, 0], sizes = [2, 192], strides = [1, 1]} : vector<16x192xf32> to vector<2x192xf32>
    %166 = arith.truncf %163 : vector<2x64xf32> to vector<2x64xbf16>
    %cst_39 = arith.constant dense<0.000000e+00> : vector<2x192xf32>
    %167 = tpu.matmul %166, %6, %cst_39 {dimension_numbers = #tpu.dot_dimension_numbers<[1], [0], [0], [1], [0, 0, 1, 1], [], []>} : vector<2x64xbf16>, vector<64x192xbf16>, vector<2x192xf32> -> vector<2x192xf32>
    %168 = vector.extract_strided_slice %165 {offsets = [0, 0], sizes = [2, 64], strides = [1, 1]} : vector<2x192xf32> to vector<2x64xf32>
    %169 = vector.extract_strided_slice %167 {offsets = [0, 0], sizes = [2, 64], strides = [1, 1]} : vector<2x192xf32> to vector<2x64xf32>
    %170 = arith.addf %168, %169 : vector<2x64xf32>
    %171 = arith.negf %170 : vector<2x64xf32>
    %172 = math.exp %171 : vector<2x64xf32>
    %cst_40 = arith.constant 1.000000e+00 : f32
    %173 = vector.broadcast %cst_40 : f32 to vector<2x64xf32>
    %174 = arith.addf %173, %172 : vector<2x64xf32>
    %175 = arith.divf %173, %174 : vector<2x64xf32>
    %176 = vector.extract_strided_slice %165 {offsets = [0, 64], sizes = [2, 64], strides = [1, 1]} : vector<2x192xf32> to vector<2x64xf32>
    %177 = vector.extract_strided_slice %167 {offsets = [0, 64], sizes = [2, 64], strides = [1, 1]} : vector<2x192xf32> to vector<2x64xf32>
    %178 = arith.addf %176, %177 : vector<2x64xf32>
    %179 = arith.negf %178 : vector<2x64xf32>
    %180 = math.exp %179 : vector<2x64xf32>
    %cst_41 = arith.constant 1.000000e+00 : f32
    %181 = vector.broadcast %cst_41 : f32 to vector<2x64xf32>
    %182 = arith.addf %181, %180 : vector<2x64xf32>
    %183 = arith.divf %181, %182 : vector<2x64xf32>
    %184 = vector.extract_strided_slice %165 {offsets = [0, 128], sizes = [2, 64], strides = [1, 1]} : vector<2x192xf32> to vector<2x64xf32>
    %185 = vector.extract_strided_slice %167 {offsets = [0, 128], sizes = [2, 64], strides = [1, 1]} : vector<2x192xf32> to vector<2x64xf32>
    %186 = vector.broadcast %7 : vector<1x64xf32> to vector<2x64xf32>
    %187 = arith.addf %185, %186 : vector<2x64xf32>
    %188 = arith.mulf %175, %187 : vector<2x64xf32>
    %189 = arith.addf %184, %188 : vector<2x64xf32>
    %190 = math.tanh %189 : vector<2x64xf32>
    %cst_42 = arith.constant 1.000000e+00 : f32
    %191 = vector.broadcast %cst_42 : f32 to vector<2x64xf32>
    %192 = arith.subf %191, %183 : vector<2x64xf32>
    %193 = arith.mulf %192, %190 : vector<2x64xf32>
    %194 = arith.mulf %183, %163 : vector<2x64xf32>
    %195 = arith.addf %193, %194 : vector<2x64xf32>
    %c4 = arith.constant 4 : index
    %c0_43 = arith.constant 0 : index
    %c0_44 = arith.constant 0 : index
    %196 = vector.load %arg1[%c4, %c0_43, %c0_44] : memref<8x2x64xf32, #tpu.memory_space<vmem>>, vector<1x2x64xf32>
    %197 = vector.shape_cast %196 : vector<1x2x64xf32> to vector<2x64xf32>
    %198 = arith.mulf %197, %195 : vector<2x64xf32>
    %cst_45 = arith.constant 1.000000e+00 : f32
    %199 = vector.broadcast %cst_45 : f32 to vector<2x64xf32>
    %200 = arith.subf %199, %197 : vector<2x64xf32>
    %201 = arith.mulf %200, %163 : vector<2x64xf32>
    %202 = arith.addf %198, %201 : vector<2x64xf32>
    %203 = arith.mulf %197, %202 : vector<2x64xf32>
    %204 = vector.extract_strided_slice %5 {offsets = [10, 0], sizes = [2, 192], strides = [1, 1]} : vector<16x192xf32> to vector<2x192xf32>
    %205 = arith.truncf %202 : vector<2x64xf32> to vector<2x64xbf16>
    %cst_46 = arith.constant dense<0.000000e+00> : vector<2x192xf32>
    %206 = tpu.matmul %205, %6, %cst_46 {dimension_numbers = #tpu.dot_dimension_numbers<[1], [0], [0], [1], [0, 0, 1, 1], [], []>} : vector<2x64xbf16>, vector<64x192xbf16>, vector<2x192xf32> -> vector<2x192xf32>
    %207 = vector.extract_strided_slice %204 {offsets = [0, 0], sizes = [2, 64], strides = [1, 1]} : vector<2x192xf32> to vector<2x64xf32>
    %208 = vector.extract_strided_slice %206 {offsets = [0, 0], sizes = [2, 64], strides = [1, 1]} : vector<2x192xf32> to vector<2x64xf32>
    %209 = arith.addf %207, %208 : vector<2x64xf32>
    %210 = arith.negf %209 : vector<2x64xf32>
    %211 = math.exp %210 : vector<2x64xf32>
    %cst_47 = arith.constant 1.000000e+00 : f32
    %212 = vector.broadcast %cst_47 : f32 to vector<2x64xf32>
    %213 = arith.addf %212, %211 : vector<2x64xf32>
    %214 = arith.divf %212, %213 : vector<2x64xf32>
    %215 = vector.extract_strided_slice %204 {offsets = [0, 64], sizes = [2, 64], strides = [1, 1]} : vector<2x192xf32> to vector<2x64xf32>
    %216 = vector.extract_strided_slice %206 {offsets = [0, 64], sizes = [2, 64], strides = [1, 1]} : vector<2x192xf32> to vector<2x64xf32>
    %217 = arith.addf %215, %216 : vector<2x64xf32>
    %218 = arith.negf %217 : vector<2x64xf32>
    %219 = math.exp %218 : vector<2x64xf32>
    %cst_48 = arith.constant 1.000000e+00 : f32
    %220 = vector.broadcast %cst_48 : f32 to vector<2x64xf32>
    %221 = arith.addf %220, %219 : vector<2x64xf32>
    %222 = arith.divf %220, %221 : vector<2x64xf32>
    %223 = vector.extract_strided_slice %204 {offsets = [0, 128], sizes = [2, 64], strides = [1, 1]} : vector<2x192xf32> to vector<2x64xf32>
    %224 = vector.extract_strided_slice %206 {offsets = [0, 128], sizes = [2, 64], strides = [1, 1]} : vector<2x192xf32> to vector<2x64xf32>
    %225 = vector.broadcast %7 : vector<1x64xf32> to vector<2x64xf32>
    %226 = arith.addf %224, %225 : vector<2x64xf32>
    %227 = arith.mulf %214, %226 : vector<2x64xf32>
    %228 = arith.addf %223, %227 : vector<2x64xf32>
    %229 = math.tanh %228 : vector<2x64xf32>
    %cst_49 = arith.constant 1.000000e+00 : f32
    %230 = vector.broadcast %cst_49 : f32 to vector<2x64xf32>
    %231 = arith.subf %230, %222 : vector<2x64xf32>
    %232 = arith.mulf %231, %229 : vector<2x64xf32>
    %233 = arith.mulf %222, %202 : vector<2x64xf32>
    %234 = arith.addf %232, %233 : vector<2x64xf32>
    %c5 = arith.constant 5 : index
    %c0_50 = arith.constant 0 : index
    %c0_51 = arith.constant 0 : index
    %235 = vector.load %arg1[%c5, %c0_50, %c0_51] : memref<8x2x64xf32, #tpu.memory_space<vmem>>, vector<1x2x64xf32>
    %236 = vector.shape_cast %235 : vector<1x2x64xf32> to vector<2x64xf32>
    %237 = arith.mulf %236, %234 : vector<2x64xf32>
    %cst_52 = arith.constant 1.000000e+00 : f32
    %238 = vector.broadcast %cst_52 : f32 to vector<2x64xf32>
    %239 = arith.subf %238, %236 : vector<2x64xf32>
    %240 = arith.mulf %239, %202 : vector<2x64xf32>
    %241 = arith.addf %237, %240 : vector<2x64xf32>
    %242 = arith.mulf %236, %241 : vector<2x64xf32>
    %243 = vector.extract_strided_slice %5 {offsets = [12, 0], sizes = [2, 192], strides = [1, 1]} : vector<16x192xf32> to vector<2x192xf32>
    %244 = arith.truncf %241 : vector<2x64xf32> to vector<2x64xbf16>
    %cst_53 = arith.constant dense<0.000000e+00> : vector<2x192xf32>
    %245 = tpu.matmul %244, %6, %cst_53 {dimension_numbers = #tpu.dot_dimension_numbers<[1], [0], [0], [1], [0, 0, 1, 1], [], []>} : vector<2x64xbf16>, vector<64x192xbf16>, vector<2x192xf32> -> vector<2x192xf32>
    %246 = vector.extract_strided_slice %243 {offsets = [0, 0], sizes = [2, 64], strides = [1, 1]} : vector<2x192xf32> to vector<2x64xf32>
    %247 = vector.extract_strided_slice %245 {offsets = [0, 0], sizes = [2, 64], strides = [1, 1]} : vector<2x192xf32> to vector<2x64xf32>
    %248 = arith.addf %246, %247 : vector<2x64xf32>
    %249 = arith.negf %248 : vector<2x64xf32>
    %250 = math.exp %249 : vector<2x64xf32>
    %cst_54 = arith.constant 1.000000e+00 : f32
    %251 = vector.broadcast %cst_54 : f32 to vector<2x64xf32>
    %252 = arith.addf %251, %250 : vector<2x64xf32>
    %253 = arith.divf %251, %252 : vector<2x64xf32>
    %254 = vector.extract_strided_slice %243 {offsets = [0, 64], sizes = [2, 64], strides = [1, 1]} : vector<2x192xf32> to vector<2x64xf32>
    %255 = vector.extract_strided_slice %245 {offsets = [0, 64], sizes = [2, 64], strides = [1, 1]} : vector<2x192xf32> to vector<2x64xf32>
    %256 = arith.addf %254, %255 : vector<2x64xf32>
    %257 = arith.negf %256 : vector<2x64xf32>
    %258 = math.exp %257 : vector<2x64xf32>
    %cst_55 = arith.constant 1.000000e+00 : f32
    %259 = vector.broadcast %cst_55 : f32 to vector<2x64xf32>
    %260 = arith.addf %259, %258 : vector<2x64xf32>
    %261 = arith.divf %259, %260 : vector<2x64xf32>
    %262 = vector.extract_strided_slice %243 {offsets = [0, 128], sizes = [2, 64], strides = [1, 1]} : vector<2x192xf32> to vector<2x64xf32>
    %263 = vector.extract_strided_slice %245 {offsets = [0, 128], sizes = [2, 64], strides = [1, 1]} : vector<2x192xf32> to vector<2x64xf32>
    %264 = vector.broadcast %7 : vector<1x64xf32> to vector<2x64xf32>
    %265 = arith.addf %263, %264 : vector<2x64xf32>
    %266 = arith.mulf %253, %265 : vector<2x64xf32>
    %267 = arith.addf %262, %266 : vector<2x64xf32>
    %268 = math.tanh %267 : vector<2x64xf32>
    %cst_56 = arith.constant 1.000000e+00 : f32
    %269 = vector.broadcast %cst_56 : f32 to vector<2x64xf32>
    %270 = arith.subf %269, %261 : vector<2x64xf32>
    %271 = arith.mulf %270, %268 : vector<2x64xf32>
    %272 = arith.mulf %261, %241 : vector<2x64xf32>
    %273 = arith.addf %271, %272 : vector<2x64xf32>
    %c6 = arith.constant 6 : index
    %c0_57 = arith.constant 0 : index
    %c0_58 = arith.constant 0 : index
    %274 = vector.load %arg1[%c6, %c0_57, %c0_58] : memref<8x2x64xf32, #tpu.memory_space<vmem>>, vector<1x2x64xf32>
    %275 = vector.shape_cast %274 : vector<1x2x64xf32> to vector<2x64xf32>
    %276 = arith.mulf %275, %273 : vector<2x64xf32>
    %cst_59 = arith.constant 1.000000e+00 : f32
    %277 = vector.broadcast %cst_59 : f32 to vector<2x64xf32>
    %278 = arith.subf %277, %275 : vector<2x64xf32>
    %279 = arith.mulf %278, %241 : vector<2x64xf32>
    %280 = arith.addf %276, %279 : vector<2x64xf32>
    %281 = arith.mulf %275, %280 : vector<2x64xf32>
    %282 = vector.extract_strided_slice %5 {offsets = [14, 0], sizes = [2, 192], strides = [1, 1]} : vector<16x192xf32> to vector<2x192xf32>
    %283 = arith.truncf %280 : vector<2x64xf32> to vector<2x64xbf16>
    %cst_60 = arith.constant dense<0.000000e+00> : vector<2x192xf32>
    %284 = tpu.matmul %283, %6, %cst_60 {dimension_numbers = #tpu.dot_dimension_numbers<[1], [0], [0], [1], [0, 0, 1, 1], [], []>} : vector<2x64xbf16>, vector<64x192xbf16>, vector<2x192xf32> -> vector<2x192xf32>
    %285 = vector.extract_strided_slice %282 {offsets = [0, 0], sizes = [2, 64], strides = [1, 1]} : vector<2x192xf32> to vector<2x64xf32>
    %286 = vector.extract_strided_slice %284 {offsets = [0, 0], sizes = [2, 64], strides = [1, 1]} : vector<2x192xf32> to vector<2x64xf32>
    %287 = arith.addf %285, %286 : vector<2x64xf32>
    %288 = arith.negf %287 : vector<2x64xf32>
    %289 = math.exp %288 : vector<2x64xf32>
    %cst_61 = arith.constant 1.000000e+00 : f32
    %290 = vector.broadcast %cst_61 : f32 to vector<2x64xf32>
    %291 = arith.addf %290, %289 : vector<2x64xf32>
    %292 = arith.divf %290, %291 : vector<2x64xf32>
    %293 = vector.extract_strided_slice %282 {offsets = [0, 64], sizes = [2, 64], strides = [1, 1]} : vector<2x192xf32> to vector<2x64xf32>
    %294 = vector.extract_strided_slice %284 {offsets = [0, 64], sizes = [2, 64], strides = [1, 1]} : vector<2x192xf32> to vector<2x64xf32>
    %295 = arith.addf %293, %294 : vector<2x64xf32>
    %296 = arith.negf %295 : vector<2x64xf32>
    %297 = math.exp %296 : vector<2x64xf32>
    %cst_62 = arith.constant 1.000000e+00 : f32
    %298 = vector.broadcast %cst_62 : f32 to vector<2x64xf32>
    %299 = arith.addf %298, %297 : vector<2x64xf32>
    %300 = arith.divf %298, %299 : vector<2x64xf32>
    %301 = vector.extract_strided_slice %282 {offsets = [0, 128], sizes = [2, 64], strides = [1, 1]} : vector<2x192xf32> to vector<2x64xf32>
    %302 = vector.extract_strided_slice %284 {offsets = [0, 128], sizes = [2, 64], strides = [1, 1]} : vector<2x192xf32> to vector<2x64xf32>
    %303 = vector.broadcast %7 : vector<1x64xf32> to vector<2x64xf32>
    %304 = arith.addf %302, %303 : vector<2x64xf32>
    %305 = arith.mulf %292, %304 : vector<2x64xf32>
    %306 = arith.addf %301, %305 : vector<2x64xf32>
    %307 = math.tanh %306 : vector<2x64xf32>
    %cst_63 = arith.constant 1.000000e+00 : f32
    %308 = vector.broadcast %cst_63 : f32 to vector<2x64xf32>
    %309 = arith.subf %308, %300 : vector<2x64xf32>
    %310 = arith.mulf %309, %307 : vector<2x64xf32>
    %311 = arith.mulf %300, %280 : vector<2x64xf32>
    %312 = arith.addf %310, %311 : vector<2x64xf32>
    %c7 = arith.constant 7 : index
    %c0_64 = arith.constant 0 : index
    %c0_65 = arith.constant 0 : index
    %313 = vector.load %arg1[%c7, %c0_64, %c0_65] : memref<8x2x64xf32, #tpu.memory_space<vmem>>, vector<1x2x64xf32>
    %314 = vector.shape_cast %313 : vector<1x2x64xf32> to vector<2x64xf32>
    %315 = arith.mulf %314, %312 : vector<2x64xf32>
    %cst_66 = arith.constant 1.000000e+00 : f32
    %316 = vector.broadcast %cst_66 : f32 to vector<2x64xf32>
    %317 = arith.subf %316, %314 : vector<2x64xf32>
    %318 = arith.mulf %317, %280 : vector<2x64xf32>
    %319 = arith.addf %315, %318 : vector<2x64xf32>
    %320 = arith.mulf %314, %319 : vector<2x64xf32>
    %321 = tpu.concatenate %47, %86, %125, %164, %203, %242, %281, %320 in 0 : vector<2x64xf32>, vector<2x64xf32>, vector<2x64xf32>, vector<2x64xf32>, vector<2x64xf32>, vector<2x64xf32>, vector<2x64xf32>, vector<2x64xf32> -> vector<16x64xf32>
    %c0_67 = arith.constant 0 : index
    %c0_68 = arith.constant 0 : index
    %322 = vector.load %arg6[%c0_67, %c0_68] : memref<16x64xf32, #tpu.memory_space<vmem>>, vector<16x64xf32>
    tpu.vector_store %arg6[%c0_67, %c0_68], %321 {strides = array<i32>} : memref<16x64xf32, #tpu.memory_space<vmem>>, vector<16x64xf32>,
    %c0_69 = arith.constant 0 : index
    %c0_70 = arith.constant 0 : index
    %323 = vector.load %arg7[%c0_69, %c0_70] : memref<2x64xf32, #tpu.memory_space<vmem>>, vector<2x64xf32>
    tpu.vector_store %arg7[%c0_69, %c0_70], %319 {strides = array<i32>} : memref<2x64xf32, #tpu.memory_space<vmem>>, vector<2x64xf32>,
    return
  }
}

</mosaic_0001>

<llo_original>
// kernel: encoder_forward.1
$region0: #{encoder_forward.1}
  #allocation0 [shape = 'u32[]', space=smem, size = 0x4, offset = 0x4, fixed_abs, tag = 'smem constant byte address 0x4 - core index']
  #allocation1 [shape = 'u32[144,128]{1,0:T(1,128)}', space=vmem, size = 0x12000, scoped, tag = 'internal scratch']
  %s0 = inlined_call_operand.vmem [shape: bf16[16,64], index: 0, kind: input, shape index: {}]
  %s1 = inlined_call_operand.vmem [shape: f32[8,2,64], index: 1, kind: input, shape index: {}]
  %s2 = inlined_call_operand.vmem [shape: bf16[64,192], index: 2, kind: input, shape index: {}]
  %s3 = inlined_call_operand.vmem [shape: f32[1,192], index: 3, kind: input, shape index: {}]
  %s4 = inlined_call_operand.vmem [shape: bf16[64,192], index: 4, kind: input, shape index: {}]
  %s5 = inlined_call_operand.vmem [shape: f32[1,64], index: 5, kind: input, shape index: {}]
  %s6 = inlined_call_operand.vmem [shape: f32[16,64], index: 6, kind: output, shape index: {0}]
  %s7 = inlined_call_operand.hbm [shape: f32[2,64], index: 7, kind: output, shape index: {1}]
  %8 = xla_tuple %s6, %s7
  %s9 = sld [smem:[#allocation0]]
  $region42: #{encoder_forward.1} parent=0
    _
  %s11 = ssub.s32 1, %s9
  %s12 = scalar_select 0, %s11, %s9
  $region1: #{encoder_forward.1} parent=0
    #allocation2 [shape = 'u8[1024]{0}', space=vmem, size = 0x400, scoped, tag = 'output window, operand 1, single buffered']
    #allocation3 [shape = 's32[1]{0}', space=sflag, size = 0x4, scoped, tag = 'scoped memory for encoder_forward.1']
    %13 = vsyncpa [#allocation3], 0
    // Predicated region
    $region2: #{encoder_forward.1} parent=1 // pred_check
      _
    $region3: #{encoder_forward.1} parent=1 // pred_check_branch
      %15 = sbr.rel (0) target = $region5
    $region4: #{encoder_forward.1} parent=1 // pred_region
      _
    $region5: #{encoder_forward.1} parent=1 // pred_fallthru
      _
    // Predicated region
    $region6: #{encoder_forward.1} parent=1 // pred_check
      _
    $region7: #{encoder_forward.1} parent=1 // pred_check_branch
      %17 = sbr.rel (0) target = $region9
    $region8: #{encoder_forward.1} parent=1 // pred_region
      _
    $region9: #{encoder_forward.1} parent=1 // pred_fallthru
      _
    // Predicated region
    $region10: #{encoder_forward.1} parent=1 // pred_check
      _
    $region11: #{encoder_forward.1} parent=1 // pred_check_branch
      %19 = sbr.rel (0) target = $region13
    $region12: #{encoder_forward.1} parent=1 // pred_region
      _
    $region13: #{encoder_forward.1} parent=1 // pred_fallthru
      _
    // Predicated region
    $region14: #{encoder_forward.1} parent=1 // pred_check
      _
    $region15: #{encoder_forward.1} parent=1 // pred_check_branch
      %21 = sbr.rel (0) target = $region17
    $region16: #{encoder_forward.1} parent=1 // pred_region
      _
    $region17: #{encoder_forward.1} parent=1 // pred_fallthru
      _
    // Predicated region
    $region18: #{encoder_forward.1} parent=1 // pred_check
      _
    $region19: #{encoder_forward.1} parent=1 // pred_check_branch
      %23 = sbr.rel (0) target = $region21
    $region20: #{encoder_forward.1} parent=1 // pred_region
      _
    $region21: #{encoder_forward.1} parent=1 // pred_fallthru
      _
    // Predicated region
    $region22: #{encoder_forward.1} parent=1 // pred_check
      _
    $region23: #{encoder_forward.1} parent=1 // pred_check_branch
      %25 = sbr.rel (0) target = $region25
    $region24: #{encoder_forward.1} parent=1 // pred_region
      _
    $region25: #{encoder_forward.1} parent=1 // pred_fallthru
      _
    %v27 = vld [vmem:[%s0] sm:$0xf]
    %v28 = vld [vmem:[%s0 + $0x4] sm:$0xf]
    %v29 = vld [vmem:[%s2] sm:$0xff]
    %v30 = vld [vmem:[%s2 + $0x8] sm:$0xff]
    %v31 = vld [vmem:[%s2 + $0x10] sm:$0xff]
    %v32 = vld [vmem:[%s2 + $0x18] sm:$0xff]
    %v33 = vld [vmem:[%s2 + $0x20] sm:$0xff]
    %v34 = vld [vmem:[%s2 + $0x28] sm:$0xff]
    %v35 = vld [vmem:[%s2 + $0x30] sm:$0xff]
    %v36 = vld [vmem:[%s2 + $0x38] sm:$0xff]
    %v37 = vld [vmem:[%s3] sm:$0x3]
    %v39 = vlaneseq
    %v40 = vshrl.u32 %v39, 7
    %v41 = vsub.s32 0, %v40
    %v42 = vrot.slane %v37, %v41
    %v43 = vlaneseq
    %v44 = vshrl.u32 %v43, 7
    %v45 = vsub.s32 1, %v44
    %v46 = vrot.slane %v37, %v45
    %v51 = vunpack.c.l.b16 %v27
    %v52 = vunpack.c.l.b16 %v28
    %v53 = vpack.c.b16 %v52, %v51
    %v62 = vunpack.c.l.b16 %v29
    %v63 = vunpack.c.h.b16 %v29
    %v64 = vunpack.c.l.b16 %v30
    %v65 = vunpack.c.h.b16 %v30
    %v66 = vunpack.c.l.b16 %v31
    %v67 = vunpack.c.h.b16 %v31
    %v68 = vunpack.c.l.b16 %v32
    %v69 = vunpack.c.h.b16 %v32
    %v70 = vunpack.c.l.b16 %v33
    %v71 = vunpack.c.h.b16 %v33
    %v72 = vunpack.c.l.b16 %v34
    %v73 = vunpack.c.h.b16 %v34
    %v74 = vunpack.c.l.b16 %v35
    %v75 = vunpack.c.h.b16 %v35
    %v76 = vunpack.c.l.b16 %v36
    %v77 = vunpack.c.h.b16 %v36
    %v78 = vpack.c.b16 %v64, %v62
    %v79 = vpack.c.b16 %v65, %v63
    %v80 = vpack.c.b16 %v68, %v66
    %v81 = vpack.c.b16 %v69, %v67
    %v82 = vpack.c.b16 %v72, %v70
    %v83 = vpack.c.b16 %v73, %v71
    %v84 = vpack.c.b16 %v76, %v74
    %v85 = vpack.c.b16 %v77, %v75
    %vm94 = vcmask 523264
    %v96 = vsel %vm94, %v53, 0
    %98 = vmatprep.subr.bf16.mxu0 %v79
    %99 = vmatpush1.bf16.msra.mxu0 %v78
    %100 = vmatprep.subr.bf16.mxu0 %v81
    %101 = vmatpush1.bf16.msra.mxu0 %v80
    %102 = vmatprep.subr.bf16.mxu0 %v83
    %103 = vmatpush1.bf16.msra.mxu0 %v82
    %104 = vmatprep.subr.bf16.mxu0 %v85
    %105 = vmatpush1.bf16.msra.mxu0 %v84
    %106 = vmatprep.subr.bf16.mxu0 0
    %107 = vmatpush1.bf16.msra.mxu0 0
    %108 = vmatprep.subr.bf16.mxu0 0
    %109 = vmatpush1.bf16.msra.mxu0 0
    %110 = vmatprep.subr.bf16.mxu0 0
    %111 = vmatpush1.bf16.msra.mxu0 0
    %112 = vmatprep.subr.bf16.mxu0 0
    %113 = vmatpush1.bf16.msra.mxu0 0
    %114 = vmatprep.subr.bf16.mxu0 0
    %115 = vmatpush1.bf16.msra.mxu0 0
    %116 = vmatprep.subr.bf16.mxu0 0
    %117 = vmatpush1.bf16.msra.mxu0 0
    %118 = vmatprep.subr.bf16.mxu0 0
    %119 = vmatpush1.bf16.msra.mxu0 0
    %120 = vmatprep.subr.bf16.mxu0 0
    %121 = vmatpush1.bf16.msra.mxu0 0
    %122 = vmatprep.subr.bf16.mxu0 0
    %123 = vmatpush1.bf16.msra.mxu0 0
    %124 = vmatprep.subr.bf16.mxu0 0
    %125 = vmatpush1.bf16.msra.mxu0 0
    %126 = vmatprep.subr.bf16.mxu0 0
    %127 = vmatpush1.bf16.msra.mxu0 0
    %128 = vmatprep.subr.bf16.mxu0 0
    %129 = vmatpush1.bf16.msra.mxu0 0
    %130 = vmatprep.mubr.bf16.mxu0 0
    %131 = vmatmul.mubr.bf16.gmra.mrb[0].mxu0 %v96
    %v132 = vpop.f32.mrb[0].mxu0
    %v133 = vadd.f32 %v42, %v132
    %v134 = vpop.f32.mrb[0].mxu0
    %v135 = vadd.f32 %v46, %v134
    %v136 = vpop.f32.mrb[0].mxu0
    %v137 = vadd.f32 %v42, %v136
    %v138 = vpop.f32.mrb[0].mxu0
    %v139 = vadd.f32 %v46, %v138
    %140 = vdwg.mxu0
    %v141 = vld [vmem:[%s4] sm:$0xff]
    %v142 = vld [vmem:[%s4 + $0x8] sm:$0xff]
    %v143 = vld [vmem:[%s4 + $0x10] sm:$0xff]
    %v144 = vld [vmem:[%s4 + $0x18] sm:$0xff]
    %v145 = vld [vmem:[%s4 + $0x20] sm:$0xff]
    %v146 = vld [vmem:[%s4 + $0x28] sm:$0xff]
    %v147 = vld [vmem:[%s4 + $0x30] sm:$0xff]
    %v148 = vld [vmem:[%s4 + $0x38] sm:$0xff]
    %v149 = vld [vmem:[%s5] sm:$0x1]
    %v158 = vunpack.c.l.b16 %v141
    %v159 = vunpack.c.h.b16 %v141
    %v160 = vunpack.c.l.b16 %v142
    %v161 = vunpack.c.h.b16 %v142
    %v162 = vunpack.c.l.b16 %v143
    %v163 = vunpack.c.h.b16 %v143
    %v164 = vunpack.c.l.b16 %v144
    %v165 = vunpack.c.h.b16 %v144
    %v166 = vunpack.c.l.b16 %v145
    %v167 = vunpack.c.h.b16 %v145
    %v168 = vunpack.c.l.b16 %v146
    %v169 = vunpack.c.h.b16 %v146
    %v170 = vunpack.c.l.b16 %v147
    %v171 = vunpack.c.h.b16 %v147
    %v172 = vunpack.c.l.b16 %v148
    %v173 = vunpack.c.h.b16 %v148
    %v174 = vpack.c.b16 %v160, %v158
    %v175 = vpack.c.b16 %v161, %v159
    %v176 = vpack.c.b16 %v164, %v162
    %v177 = vpack.c.b16 %v165, %v163
    %v178 = vpack.c.b16 %v168, %v166
    %v179 = vpack.c.b16 %v169, %v167
    %v180 = vpack.c.b16 %v172, %v170
    %v181 = vpack.c.b16 %v173, %v171
    %v191 = vsel %vm94, 0, 0
    %193 = vmatprep.subr.bf16.mxu0 %v175
    %194 = vmatpush1.bf16.msra.mxu0 %v174
    %195 = vmatprep.subr.bf16.mxu0 %v177
    %196 = vmatpush1.bf16.msra.mxu0 %v176
    %197 = vmatprep.subr.bf16.mxu0 %v179
    %198 = vmatpush1.bf16.msra.mxu0 %v178
    %199 = vmatprep.subr.bf16.mxu0 %v181
    %200 = vmatpush1.bf16.msra.mxu0 %v180
    %201 = vmatprep.subr.bf16.mxu0 0
    %202 = vmatpush1.bf16.msra.mxu0 0
    %203 = vmatprep.subr.bf16.mxu0 0
    %204 = vmatpush1.bf16.msra.mxu0 0
    %205 = vmatprep.subr.bf16.mxu0 0
    %206 = vmatpush1.bf16.msra.mxu0 0
    %207 = vmatprep.subr.bf16.mxu0 0
    %208 = vmatpush1.bf16.msra.mxu0 0
    %209 = vmatprep.subr.bf16.mxu0 0
    %210 = vmatpush1.bf16.msra.mxu0 0
    %211 = vmatprep.subr.bf16.mxu0 0
    %212 = vmatpush1.bf16.msra.mxu0 0
    %213 = vmatprep.subr.bf16.mxu0 0
    %214 = vmatpush1.bf16.msra.mxu0 0
    %215 = vmatprep.subr.bf16.mxu0 0
    %216 = vmatpush1.bf16.msra.mxu0 0
    %217 = vmatprep.subr.bf16.mxu0 0
    %218 = vmatpush1.bf16.msra.mxu0 0
    %219 = vmatprep.subr.bf16.mxu0 0
    %220 = vmatpush1.bf16.msra.mxu0 0
    %221 = vmatprep.subr.bf16.mxu0 0
    %222 = vmatpush1.bf16.msra.mxu0 0
    %223 = vmatprep.subr.bf16.mxu0 0
    %224 = vmatpush1.bf16.msra.mxu0 0
    %225 = vmatprep.mubr.bf16.mxu0 0
    %226 = vmatmul.mubr.bf16.gmra.mrb[0].mxu0 %v191
    %v227 = vpop.f32.mrb[0].mxu0
    %v228 = vadd.f32 0.0, %v227
    %v229 = vpop.f32.mrb[0].mxu0
    %v230 = vadd.f32 0.0, %v229
    %v231 = vpop.f32.mrb[0].mxu0
    %v232 = vpop.f32.mrb[0].mxu0
    %233 = vdwg.mxu0
    %v234 = vadd.f32 %v133, %v228
    %v235 = vxor.u32 %v234, 2147483648
    %v236 = vmul.f32 %v235, 1.442695
    %v237 = vpow.pop %v236
    %v238 = vadd.f32 %v237, 1.0
    %v239 = vrcp.pop %v238
    %v240 = vmul.f32 1.0, %v239
    %v242 = vlaneseq
    %v243 = vshrl.u32 %v242, 7
    %v244 = vsub.s32 0, %v243
    %v245 = vrot.slane %v149, %v244
    %v247 = vadd.f32 %v230, %v245
    %v248 = vmul.f32 %v240, %v247
    %v249 = vadd.f32 %v135, %v248
    %v250 = vtanh.pop %v249
    %v251 = vsub.f32 1.0, %v240
    %253 = vrot.lane.b32.xlu0 %v250, 64
    %v254 = vpop.permute.xlu0 %253
    %v256 = vmul.f32 %v251, %v254
    %v257 = vmul.f32 %v240, 0.0
    %v258 = vadd.f32 %v256, %v257
    %v259 = vld [vmem:[%s1] sm:$0x3]
    %261 = vrot.lane.b32.xlu0 %v258, 64
    %v262 = vpop.permute.xlu0 %261
    %v264 = vmul.f32 %v259, %v262
    %v265 = vsub.f32 1.0, %v259
    %v266 = vmul.f32 %v265, 0.0
    %v267 = vadd.f32 %v264, %v266
    %v268 = vmul.f32 %v259, %v267
    %v269 = vpack.c.bf16 %v267, %v267
    %v271 = vsel %vm94, %v269, 0
    %273 = vmatprep.subr.bf16.mxu0 %v175
    %274 = vmatpush1.bf16.msra.mxu0 %v174
    %275 = vmatprep.subr.bf16.mxu0 %v177
    %276 = vmatpush1.bf16.msra.mxu0 %v176
    %277 = vmatprep.subr.bf16.mxu0 %v179
    %278 = vmatpush1.bf16.msra.mxu0 %v178
    %279 = vmatprep.subr.bf16.mxu0 %v181
    %280 = vmatpush1.bf16.msra.mxu0 %v180
    %281 = vmatprep.subr.bf16.mxu0 0
    %282 = vmatpush1.bf16.msra.mxu0 0
    %283 = vmatprep.subr.bf16.mxu0 0
    %284 = vmatpush1.bf16.msra.mxu0 0
    %285 = vmatprep.subr.bf16.mxu0 0
    %286 = vmatpush1.bf16.msra.mxu0 0
    %287 = vmatprep.subr.bf16.mxu0 0
    %288 = vmatpush1.bf16.msra.mxu0 0
    %289 = vmatprep.subr.bf16.mxu0 0
    %290 = vmatpush1.bf16.msra.mxu0 0
    %291 = vmatprep.subr.bf16.mxu0 0
    %292 = vmatpush1.bf16.msra.mxu0 0
    %293 = vmatprep.subr.bf16.mxu0 0
    %294 = vmatpush1.bf16.msra.mxu0 0
    %295 = vmatprep.subr.bf16.mxu0 0
    %296 = vmatpush1.bf16.msra.mxu0 0
    %297 = vmatprep.subr.bf16.mxu0 0
    %298 = vmatpush1.bf16.msra.mxu0 0
    %299 = vmatprep.subr.bf16.mxu0 0
    %300 = vmatpush1.bf16.msra.mxu0 0
    %301 = vmatprep.subr.bf16.mxu0 0
    %302 = vmatpush1.bf16.msra.mxu0 0
    %303 = vmatprep.subr.bf16.mxu0 0
    %304 = vmatpush1.bf16.msra.mxu0 0
    %305 = vmatprep.mubr.bf16.mxu0 0
    %306 = vmatmul.mubr.bf16.gmra.mrb[0].mxu0 %v271
    %v307 = vpop.f32.mrb[0].mxu0
    %v308 = vadd.f32 0.0, %v307
    %v309 = vpop.f32.mrb[0].mxu0
    %v310 = vadd.f32 0.0, %v309
    %v311 = vpop.f32.mrb[0].mxu0
    %v312 = vpop.f32.mrb[0].mxu0
    %313 = vdwg.mxu0
    %v315 = vrot.slane %v308, 6
    %v317 = vadd.f32 %v133, %v315
    %v318 = vxor.u32 %v317, 2147483648
    %v319 = vmul.f32 %v318, 1.442695
    %v320 = vpow.pop %v319
    %v321 = vadd.f32 %v320, 1.0
    %v322 = vrcp.pop %v321
    %v323 = vmul.f32 1.0, %v322
    %v324 = vadd.f32 %v310, %v245
    %v326 = vrot.slane %v324, 6
    %v328 = vmul.f32 %v323, %v326
    %v329 = vadd.f32 %v135, %v328
    %v330 = vtanh.pop %v329
    %v331 = vsub.f32 1.0, %v323
    %333 = vrot.lane.b32.xlu0 %v330, 64
    %v334 = vpop.permute.xlu0 %333
    %v336 = vmul.f32 %v331, %v334
    %v338 = vrot.slane %v267, 6
    %339 = vrot.lane.b32.xlu0 %v338, 64
    %v340 = vpop.permute.xlu0 %339
    %v342 = vmul.f32 %v323, %v340
    %v343 = vadd.f32 %v336, %v342
    %s344 = scalar_lea.vmem %s1, 2
    %v345 = vld [vmem:[%s344] sm:$0x3]
    %v347 = vrot.slane %v343, 2
    %348 = vrot.lane.b32.xlu0 %v347, 64
    %v349 = vpop.permute.xlu0 %348
    %v351 = vmul.f32 %v345, %v349
    %v352 = vsub.f32 1.0, %v345
    %v353 = vmul.f32 %v352, %v267
    %v354 = vadd.f32 %v351, %v353
    %v355 = vmul.f32 %v345, %v354
    %v356 = vpack.c.bf16 %v354, %v354
    %v358 = vsel %vm94, %v356, 0
    %360 = vmatprep.subr.bf16.mxu0 %v175
    %361 = vmatpush1.bf16.msra.mxu0 %v174
    %362 = vmatprep.subr.bf16.mxu0 %v177
    %363 = vmatpush1.bf16.msra.mxu0 %v176
    %364 = vmatprep.subr.bf16.mxu0 %v179
    %365 = vmatpush1.bf16.msra.mxu0 %v178
    %366 = vmatprep.subr.bf16.mxu0 %v181
    %367 = vmatpush1.bf16.msra.mxu0 %v180
    %368 = vmatprep.subr.bf16.mxu0 0
    %369 = vmatpush1.bf16.msra.mxu0 0
    %370 = vmatprep.subr.bf16.mxu0 0
    %371 = vmatpush1.bf16.msra.mxu0 0
    %372 = vmatprep.subr.bf16.mxu0 0
    %373 = vmatpush1.bf16.msra.mxu0 0
    %374 = vmatprep.subr.bf16.mxu0 0
    %375 = vmatpush1.bf16.msra.mxu0 0
    %376 = vmatprep.subr.bf16.mxu0 0
    %377 = vmatpush1.bf16.msra.mxu0 0
    %378 = vmatprep.subr.bf16.mxu0 0
    %379 = vmatpush1.bf16.msra.mxu0 0
    %380 = vmatprep.subr.bf16.mxu0 0
    %381 = vmatpush1.bf16.msra.mxu0 0
    %382 = vmatprep.subr.bf16.mxu0 0
    %383 = vmatpush1.bf16.msra.mxu0 0
    %384 = vmatprep.subr.bf16.mxu0 0
    %385 = vmatpush1.bf16.msra.mxu0 0
    %386 = vmatprep.subr.bf16.mxu0 0
    %387 = vmatpush1.bf16.msra.mxu0 0
    %388 = vmatprep.subr.bf16.mxu0 0
    %389 = vmatpush1.bf16.msra.mxu0 0
    %390 = vmatprep.subr.bf16.mxu0 0
    %391 = vmatpush1.bf16.msra.mxu0 0
    %392 = vmatprep.mubr.bf16.mxu0 0
    %393 = vmatmul.mubr.bf16.gmra.mrb[0].mxu0 %v358
    %v394 = vpop.f32.mrb[0].mxu0
    %v395 = vadd.f32 0.0, %v394
    %v396 = vpop.f32.mrb[0].mxu0
    %v397 = vadd.f32 0.0, %v396
    %v398 = vpop.f32.mrb[0].mxu0
    %v399 = vpop.f32.mrb[0].mxu0
    %400 = vdwg.mxu0
    %v402 = vrot.slane %v395, 4
    %v404 = vadd.f32 %v133, %v402
    %v405 = vxor.u32 %v404, 2147483648
    %v406 = vmul.f32 %v405, 1.442695
    %v407 = vpow.pop %v406
    %v408 = vadd.f32 %v407, 1.0
    %v409 = vrcp.pop %v408
    %v410 = vmul.f32 1.0, %v409
    %v411 = vadd.f32 %v397, %v245
    %v413 = vrot.slane %v411, 4
    %v415 = vmul.f32 %v410, %v413
    %v416 = vadd.f32 %v135, %v415
    %v417 = vtanh.pop %v416
    %v418 = vsub.f32 1.0, %v410
    %420 = vrot.lane.b32.xlu0 %v417, 64
    %v421 = vpop.permute.xlu0 %420
    %v423 = vmul.f32 %v418, %v421
    %v425 = vrot.slane %v354, 4
    %426 = vrot.lane.b32.xlu0 %v425, 64
    %v427 = vpop.permute.xlu0 %426
    %v429 = vmul.f32 %v410, %v427
    %v430 = vadd.f32 %v423, %v429
    %s431 = scalar_lea.vmem %s1, 4
    %v432 = vld [vmem:[%s431] sm:$0x3]
    %v434 = vrot.slane %v430, 4
    %435 = vrot.lane.b32.xlu0 %v434, 64
    %v436 = vpop.permute.xlu0 %435
    %v438 = vmul.f32 %v432, %v436
    %v439 = vsub.f32 1.0, %v432
    %v440 = vmul.f32 %v439, %v354
    %v441 = vadd.f32 %v438, %v440
    %v442 = vmul.f32 %v432, %v441
    %v443 = vpack.c.bf16 %v441, %v441
    %v445 = vsel %vm94, %v443, 0
    %447 = vmatprep.subr.bf16.mxu0 %v175
    %448 = vmatpush1.bf16.msra.mxu0 %v174
    %449 = vmatprep.subr.bf16.mxu0 %v177
    %450 = vmatpush1.bf16.msra.mxu0 %v176
    %451 = vmatprep.subr.bf16.mxu0 %v179
    %452 = vmatpush1.bf16.msra.mxu0 %v178
    %453 = vmatprep.subr.bf16.mxu0 %v181
    %454 = vmatpush1.bf16.msra.mxu0 %v180
    %455 = vmatprep.subr.bf16.mxu0 0
    %456 = vmatpush1.bf16.msra.mxu0 0
    %457 = vmatprep.subr.bf16.mxu0 0
    %458 = vmatpush1.bf16.msra.mxu0 0
    %459 = vmatprep.subr.bf16.mxu0 0
    %460 = vmatpush1.bf16.msra.mxu0 0
    %461 = vmatprep.subr.bf16.mxu0 0
    %462 = vmatpush1.bf16.msra.mxu0 0
    %463 = vmatprep.subr.bf16.mxu0 0
    %464 = vmatpush1.bf16.msra.mxu0 0
    %465 = vmatprep.subr.bf16.mxu0 0
    %466 = vmatpush1.bf16.msra.mxu0 0
    %467 = vmatprep.subr.bf16.mxu0 0
    %468 = vmatpush1.bf16.msra.mxu0 0
    %469 = vmatprep.subr.bf16.mxu0 0
    %470 = vmatpush1.bf16.msra.mxu0 0
    %471 = vmatprep.subr.bf16.mxu0 0
    %472 = vmatpush1.bf16.msra.mxu0 0
    %473 = vmatprep.subr.bf16.mxu0 0
    %474 = vmatpush1.bf16.msra.mxu0 0
    %475 = vmatprep.subr.bf16.mxu0 0
    %476 = vmatpush1.bf16.msra.mxu0 0
    %477 = vmatprep.subr.bf16.mxu0 0
    %478 = vmatpush1.bf16.msra.mxu0 0
    %479 = vmatprep.mubr.bf16.mxu0 0
    %480 = vmatmul.mubr.bf16.gmra.mrb[0].mxu0 %v445
    %v481 = vpop.f32.mrb[0].mxu0
    %v482 = vadd.f32 0.0, %v481
    %v483 = vpop.f32.mrb[0].mxu0
    %v484 = vadd.f32 0.0, %v483
    %v485 = vpop.f32.mrb[0].mxu0
    %v486 = vpop.f32.mrb[0].mxu0
    %487 = vdwg.mxu0
    %v489 = vrot.slane %v482, 2
    %v491 = vadd.f32 %v133, %v489
    %v492 = vxor.u32 %v491, 2147483648
    %v493 = vmul.f32 %v492, 1.442695
    %v494 = vpow.pop %v493
    %v495 = vadd.f32 %v494, 1.0
    %v496 = vrcp.pop %v495
    %v497 = vmul.f32 1.0, %v496
    %v498 = vadd.f32 %v484, %v245
    %v500 = vrot.slane %v498, 2
    %v502 = vmul.f32 %v497, %v500
    %v503 = vadd.f32 %v135, %v502
    %v504 = vtanh.pop %v503
    %v505 = vsub.f32 1.0, %v497
    %507 = vrot.lane.b32.xlu0 %v504, 64
    %v508 = vpop.permute.xlu0 %507
    %v510 = vmul.f32 %v505, %v508
    %v512 = vrot.slane %v441, 2
    %513 = vrot.lane.b32.xlu0 %v512, 64
    %v514 = vpop.permute.xlu0 %513
    %v516 = vmul.f32 %v497, %v514
    %v517 = vadd.f32 %v510, %v516
    %s518 = scalar_lea.vmem %s1, 6
    %v519 = vld [vmem:[%s518] sm:$0x3]
    %v521 = vrot.slane %v517, 6
    %522 = vrot.lane.b32.xlu0 %v521, 64
    %v523 = vpop.permute.xlu0 %522
    %v525 = vmul.f32 %v519, %v523
    %v526 = vsub.f32 1.0, %v519
    %v527 = vmul.f32 %v526, %v441
    %v528 = vadd.f32 %v525, %v527
    %v529 = vmul.f32 %v519, %v528
    %v530 = vpack.c.bf16 %v528, %v528
    %v532 = vsel %vm94, %v530, 0
    %534 = vmatprep.subr.bf16.mxu0 %v175
    %535 = vmatpush1.bf16.msra.mxu0 %v174
    %536 = vmatprep.subr.bf16.mxu0 %v177
    %537 = vmatpush1.bf16.msra.mxu0 %v176
    %538 = vmatprep.subr.bf16.mxu0 %v179
    %539 = vmatpush1.bf16.msra.mxu0 %v178
    %540 = vmatprep.subr.bf16.mxu0 %v181
    %541 = vmatpush1.bf16.msra.mxu0 %v180
    %542 = vmatprep.subr.bf16.mxu0 0
    %543 = vmatpush1.bf16.msra.mxu0 0
    %544 = vmatprep.subr.bf16.mxu0 0
    %545 = vmatpush1.bf16.msra.mxu0 0
    %546 = vmatprep.subr.bf16.mxu0 0
    %547 = vmatpush1.bf16.msra.mxu0 0
    %548 = vmatprep.subr.bf16.mxu0 0
    %549 = vmatpush1.bf16.msra.mxu0 0
    %550 = vmatprep.subr.bf16.mxu0 0
    %551 = vmatpush1.bf16.msra.mxu0 0
    %552 = vmatprep.subr.bf16.mxu0 0
    %553 = vmatpush1.bf16.msra.mxu0 0
    %554 = vmatprep.subr.bf16.mxu0 0
    %555 = vmatpush1.bf16.msra.mxu0 0
    %556 = vmatprep.subr.bf16.mxu0 0
    %557 = vmatpush1.bf16.msra.mxu0 0
    %558 = vmatprep.subr.bf16.mxu0 0
    %559 = vmatpush1.bf16.msra.mxu0 0
    %560 = vmatprep.subr.bf16.mxu0 0
    %561 = vmatpush1.bf16.msra.mxu0 0
    %562 = vmatprep.subr.bf16.mxu0 0
    %563 = vmatpush1.bf16.msra.mxu0 0
    %564 = vmatprep.subr.bf16.mxu0 0
    %565 = vmatpush1.bf16.msra.mxu0 0
    %566 = vmatprep.mubr.bf16.mxu0 0
    %567 = vmatmul.mubr.bf16.gmra.mrb[0].mxu0 %v532
    %v568 = vpop.f32.mrb[0].mxu0
    %v569 = vadd.f32 0.0, %v568
    %v570 = vpop.f32.mrb[0].mxu0
    %v571 = vadd.f32 0.0, %v570
    %v572 = vpop.f32.mrb[0].mxu0
    %v573 = vpop.f32.mrb[0].mxu0
    %574 = vdwg.mxu0
    %v575 = vadd.f32 %v137, %v569
    %v576 = vxor.u32 %v575, 2147483648
    %v577 = vmul.f32 %v576, 1.442695
    %v578 = vpow.pop %v577
    %v579 = vadd.f32 %v578, 1.0
    %v580 = vrcp.pop %v579
    %v581 = vmul.f32 1.0, %v580
    %v582 = vadd.f32 %v571, %v245
    %v583 = vmul.f32 %v581, %v582
    %v584 = vadd.f32 %v139, %v583
    %v585 = vtanh.pop %v584
    %v586 = vsub.f32 1.0, %v581
    %588 = vrot.lane.b32.xlu0 %v585, 64
    %v589 = vpop.permute.xlu0 %588
    %v591 = vmul.f32 %v586, %v589
    %593 = vrot.lane.b32.xlu0 %v528, 64
    %v594 = vpop.permute.xlu0 %593
    %v596 = vmul.f32 %v581, %v594
    %v597 = vadd.f32 %v591, %v596
    %s598 = scalar_lea.vmem %s1, 8
    %v599 = vld [vmem:[%s598] sm:$0x3]
    %601 = vrot.lane.b32.xlu0 %v597, 64
    %v602 = vpop.permute.xlu0 %601
    %v604 = vmul.f32 %v599, %v602
    %v605 = vsub.f32 1.0, %v599
    %v606 = vmul.f32 %v605, %v528
    %v607 = vadd.f32 %v604, %v606
    %v608 = vmul.f32 %v599, %v607
    %v609 = vpack.c.bf16 %v607, %v607
    %v611 = vsel %vm94, %v609, 0
    %613 = vmatprep.subr.bf16.mxu0 %v175
    %614 = vmatpush1.bf16.msra.mxu0 %v174
    %615 = vmatprep.subr.bf16.mxu0 %v177
    %616 = vmatpush1.bf16.msra.mxu0 %v176
    %617 = vmatprep.subr.bf16.mxu0 %v179
    %618 = vmatpush1.bf16.msra.mxu0 %v178
    %619 = vmatprep.subr.bf16.mxu0 %v181
    %620 = vmatpush1.bf16.msra.mxu0 %v180
    %621 = vmatprep.subr.bf16.mxu0 0
    %622 = vmatpush1.bf16.msra.mxu0 0
    %623 = vmatprep.subr.bf16.mxu0 0
    %624 = vmatpush1.bf16.msra.mxu0 0
    %625 = vmatprep.subr.bf16.mxu0 0
    %626 = vmatpush1.bf16.msra.mxu0 0
    %627 = vmatprep.subr.bf16.mxu0 0
    %628 = vmatpush1.bf16.msra.mxu0 0
    %629 = vmatprep.subr.bf16.mxu0 0
    %630 = vmatpush1.bf16.msra.mxu0 0
    %631 = vmatprep.subr.bf16.mxu0 0
    %632 = vmatpush1.bf16.msra.mxu0 0
    %633 = vmatprep.subr.bf16.mxu0 0
    %634 = vmatpush1.bf16.msra.mxu0 0
    %635 = vmatprep.subr.bf16.mxu0 0
    %636 = vmatpush1.bf16.msra.mxu0 0
    %637 = vmatprep.subr.bf16.mxu0 0
    %638 = vmatpush1.bf16.msra.mxu0 0
    %639 = vmatprep.subr.bf16.mxu0 0
    %640 = vmatpush1.bf16.msra.mxu0 0
    %641 = vmatprep.subr.bf16.mxu0 0
    %642 = vmatpush1.bf16.msra.mxu0 0
    %643 = vmatprep.subr.bf16.mxu0 0
    %644 = vmatpush1.bf16.msra.mxu0 0
    %645 = vmatprep.mubr.bf16.mxu0 0
    %646 = vmatmul.mubr.bf16.gmra.mrb[0].mxu0 %v611
    %v647 = vpop.f32.mrb[0].mxu0
    %v648 = vadd.f32 0.0, %v647
    %v649 = vpop.f32.mrb[0].mxu0
    %v650 = vadd.f32 0.0, %v649
    %v651 = vpop.f32.mrb[0].mxu0
    %v652 = vpop.f32.mrb[0].mxu0
    %653 = vdwg.mxu0
    %v655 = vrot.slane %v648, 6
    %v657 = vadd.f32 %v137, %v655
    %v658 = vxor.u32 %v657, 2147483648
    %v659 = vmul.f32 %v658, 1.442695
    %v660 = vpow.pop %v659
    %v661 = vadd.f32 %v660, 1.0
    %v662 = vrcp.pop %v661
    %v663 = vmul.f32 1.0, %v662
    %v664 = vadd.f32 %v650, %v245
    %v666 = vrot.slane %v664, 6
    %v668 = vmul.f32 %v663, %v666
    %v669 = vadd.f32 %v139, %v668
    %v670 = vtanh.pop %v669
    %v671 = vsub.f32 1.0, %v663
    %673 = vrot.lane.b32.xlu0 %v670, 64
    %v674 = vpop.permute.xlu0 %673
    %v676 = vmul.f32 %v671, %v674
    %v678 = vrot.slane %v607, 6
    %679 = vrot.lane.b32.xlu0 %v678, 64
    %v680 = vpop.permute.xlu0 %679
    %v682 = vmul.f32 %v663, %v680
    %v683 = vadd.f32 %v676, %v682
    %s684 = scalar_lea.vmem %s1, 10
    %v685 = vld [vmem:[%s684] sm:$0x3]
    %v687 = vrot.slane %v683, 2
    %688 = vrot.lane.b32.xlu0 %v687, 64
    %v689 = vpop.permute.xlu0 %688
    %v691 = vmul.f32 %v685, %v689
    %v692 = vsub.f32 1.0, %v685
    %v693 = vmul.f32 %v692, %v607
    %v694 = vadd.f32 %v691, %v693
    %v695 = vmul.f32 %v685, %v694
    %v696 = vpack.c.bf16 %v694, %v694
    %v698 = vsel %vm94, %v696, 0
    %700 = vmatprep.subr.bf16.mxu0 %v175
    %701 = vmatpush1.bf16.msra.mxu0 %v174
    %702 = vmatprep.subr.bf16.mxu0 %v177
    %703 = vmatpush1.bf16.msra.mxu0 %v176
    %704 = vmatprep.subr.bf16.mxu0 %v179
    %705 = vmatpush1.bf16.msra.mxu0 %v178
    %706 = vmatprep.subr.bf16.mxu0 %v181
    %707 = vmatpush1.bf16.msra.mxu0 %v180
    %708 = vmatprep.subr.bf16.mxu0 0
    %709 = vmatpush1.bf16.msra.mxu0 0
    %710 = vmatprep.subr.bf16.mxu0 0
    %711 = vmatpush1.bf16.msra.mxu0 0
    %712 = vmatprep.subr.bf16.mxu0 0
    %713 = vmatpush1.bf16.msra.mxu0 0
    %714 = vmatprep.subr.bf16.mxu0 0
    %715 = vmatpush1.bf16.msra.mxu0 0
    %716 = vmatprep.subr.bf16.mxu0 0
    %717 = vmatpush1.bf16.msra.mxu0 0
    %718 = vmatprep.subr.bf16.mxu0 0
    %719 = vmatpush1.bf16.msra.mxu0 0
    %720 = vmatprep.subr.bf16.mxu0 0
    %721 = vmatpush1.bf16.msra.mxu0 0
    %722 = vmatprep.subr.bf16.mxu0 0
    %723 = vmatpush1.bf16.msra.mxu0 0
    %724 = vmatprep.subr.bf16.mxu0 0
    %725 = vmatpush1.bf16.msra.mxu0 0
    %726 = vmatprep.subr.bf16.mxu0 0
    %727 = vmatpush1.bf16.msra.mxu0 0
    %728 = vmatprep.subr.bf16.mxu0 0
    %729 = vmatpush1.bf16.msra.mxu0 0
    %730 = vmatprep.subr.bf16.mxu0 0
    %731 = vmatpush1.bf16.msra.mxu0 0
    %732 = vmatprep.mubr.bf16.mxu0 0
    %733 = vmatmul.mubr.bf16.gmra.mrb[0].mxu0 %v698
    %v734 = vpop.f32.mrb[0].mxu0
    %v735 = vadd.f32 0.0, %v734
    %v736 = vpop.f32.mrb[0].mxu0
    %v737 = vadd.f32 0.0, %v736
    %v738 = vpop.f32.mrb[0].mxu0
    %v739 = vpop.f32.mrb[0].mxu0
    %740 = vdwg.mxu0
    %v742 = vrot.slane %v735, 4
    %v744 = vadd.f32 %v137, %v742
    %v745 = vxor.u32 %v744, 2147483648
    %v746 = vmul.f32 %v745, 1.442695
    %v747 = vpow.pop %v746
    %v748 = vadd.f32 %v747, 1.0
    %v749 = vrcp.pop %v748
    %v750 = vmul.f32 1.0, %v749
    %v751 = vadd.f32 %v737, %v245
    %v753 = vrot.slane %v751, 4
    %v755 = vmul.f32 %v750, %v753
    %v756 = vadd.f32 %v139, %v755
    %v757 = vtanh.pop %v756
    %v758 = vsub.f32 1.0, %v750
    %760 = vrot.lane.b32.xlu0 %v757, 64
    %v761 = vpop.permute.xlu0 %760
    %v763 = vmul.f32 %v758, %v761
    %v765 = vrot.slane %v694, 4
    %766 = vrot.lane.b32.xlu0 %v765, 64
    %v767 = vpop.permute.xlu0 %766
    %v769 = vmul.f32 %v750, %v767
    %v770 = vadd.f32 %v763, %v769
    %s771 = scalar_lea.vmem %s1, 12
    %v772 = vld [vmem:[%s771] sm:$0x3]
    %v774 = vrot.slane %v770, 4
    %775 = vrot.lane.b32.xlu0 %v774, 64
    %v776 = vpop.permute.xlu0 %775
    %v778 = vmul.f32 %v772, %v776
    %v779 = vsub.f32 1.0, %v772
    %v780 = vmul.f32 %v779, %v694
    %v781 = vadd.f32 %v778, %v780
    %v782 = vmul.f32 %v772, %v781
    %v783 = vpack.c.bf16 %v781, %v781
    %v785 = vsel %vm94, %v783, 0
    %787 = vmatprep.subr.bf16.mxu0 %v175
    %788 = vmatpush1.bf16.msra.mxu0 %v174
    %789 = vmatprep.subr.bf16.mxu0 %v177
    %790 = vmatpush1.bf16.msra.mxu0 %v176
    %791 = vmatprep.subr.bf16.mxu0 %v179
    %792 = vmatpush1.bf16.msra.mxu0 %v178
    %793 = vmatprep.subr.bf16.mxu0 %v181
    %794 = vmatpush1.bf16.msra.mxu0 %v180
    %795 = vmatprep.subr.bf16.mxu0 0
    %796 = vmatpush1.bf16.msra.mxu0 0
    %797 = vmatprep.subr.bf16.mxu0 0
    %798 = vmatpush1.bf16.msra.mxu0 0
    %799 = vmatprep.subr.bf16.mxu0 0
    %800 = vmatpush1.bf16.msra.mxu0 0
    %801 = vmatprep.subr.bf16.mxu0 0
    %802 = vmatpush1.bf16.msra.mxu0 0
    %803 = vmatprep.subr.bf16.mxu0 0
    %804 = vmatpush1.bf16.msra.mxu0 0
    %805 = vmatprep.subr.bf16.mxu0 0
    %806 = vmatpush1.bf16.msra.mxu0 0
    %807 = vmatprep.subr.bf16.mxu0 0
    %808 = vmatpush1.bf16.msra.mxu0 0
    %809 = vmatprep.subr.bf16.mxu0 0
    %810 = vmatpush1.bf16.msra.mxu0 0
    %811 = vmatprep.subr.bf16.mxu0 0
    %812 = vmatpush1.bf16.msra.mxu0 0
    %813 = vmatprep.subr.bf16.mxu0 0
    %814 = vmatpush1.bf16.msra.mxu0 0
    %815 = vmatprep.subr.bf16.mxu0 0
    %816 = vmatpush1.bf16.msra.mxu0 0
    %817 = vmatprep.subr.bf16.mxu0 0
    %818 = vmatpush1.bf16.msra.mxu0 0
    %819 = vmatprep.mubr.bf16.mxu0 0
    %820 = vmatmul.mubr.bf16.gmra.mrb[0].mxu0 %v785
    %v821 = vpop.f32.mrb[0].mxu0
    %v822 = vadd.f32 0.0, %v821
    %v823 = vpop.f32.mrb[0].mxu0
    %v824 = vadd.f32 0.0, %v823
    %v825 = vpop.f32.mrb[0].mxu0
    %v826 = vpop.f32.mrb[0].mxu0
    %827 = vdwg.mxu0
    %v829 = vrot.slane %v822, 2
    %v831 = vadd.f32 %v137, %v829
    %v832 = vxor.u32 %v831, 2147483648
    %v833 = vmul.f32 %v832, 1.442695
    %v834 = vpow.pop %v833
    %v835 = vadd.f32 %v834, 1.0
    %v836 = vrcp.pop %v835
    %v837 = vmul.f32 1.0, %v836
    %v838 = vadd.f32 %v824, %v245
    %v840 = vrot.slane %v838, 2
    %v842 = vmul.f32 %v837, %v840
    %v843 = vadd.f32 %v139, %v842
    %v844 = vtanh.pop %v843
    %v845 = vsub.f32 1.0, %v837
    %847 = vrot.lane.b32.xlu0 %v844, 64
    %v848 = vpop.permute.xlu0 %847
    %v850 = vmul.f32 %v845, %v848
    %v852 = vrot.slane %v781, 2
    %853 = vrot.lane.b32.xlu0 %v852, 64
    %v854 = vpop.permute.xlu0 %853
    %v856 = vmul.f32 %v837, %v854
    %v857 = vadd.f32 %v850, %v856
    %s858 = scalar_lea.vmem %s1, 14
    %v859 = vld [vmem:[%s858] sm:$0x3]
    %v861 = vrot.slane %v857, 6
    %862 = vrot.lane.b32.xlu0 %v861, 64
    %v863 = vpop.permute.xlu0 %862
    %v865 = vmul.f32 %v859, %v863
    %v866 = vsub.f32 1.0, %v859
    %v867 = vmul.f32 %v866, %v781
    %v868 = vadd.f32 %v865, %v867
    %v869 = vmul.f32 %v859, %v868
    %v871 = vrot.slane %v355, 6
    %v874 = vrot.slane %v442, 4
    %v877 = vrot.slane %v529, 2
    %v880 = vrot.slane %v695, 6
    %v883 = vrot.slane %v782, 4
    %v886 = vrot.slane %v869, 2
    %vm888 = vcmask 1041408
    %v889 = vsel %vm888, %v268, %v871
    %vm890 = vcmask 1043456
    %v891 = vsel %vm890, %v889, %v874
    %vm892 = vcmask 1045504
    %v893 = vsel %vm892, %v891, %v877
    %v894 = vsel %vm888, %v608, %v880
    %v895 = vsel %vm890, %v894, %v883
    %v896 = vsel %vm892, %v895, %v886
    %897 = vst.msk [vmem:[%s6] sm:$0xff] %vm94, %v893
    %898 = vst.msk [vmem:[%s6 + $0x8] sm:$0xff] %vm94, %v896
    %vm899 = vcmask 517120
    %900 = vst.msk [vmem:[#allocation2] sm:$0x3] %vm899, %v868
    // Predicated region
    $region26: #{encoder_forward.1} parent=1 // pred_check
      _
    $region27: #{encoder_forward.1} parent=1 // pred_check_branch
      %902 = sbr.rel (0) target = $region29
    $region28: #{encoder_forward.1} parent=1 // pred_region
      _
    $region29: #{encoder_forward.1} parent=1 // pred_fallthru
      _
    // Predicated region
    $region30: #{encoder_forward.1} parent=1 // pred_check
      _
    $region31: #{encoder_forward.1} parent=1 // pred_check_branch
      %904 = sbr.rel (0) target = $region33
    $region32: #{encoder_forward.1} parent=1 // pred_region
      %s906 = ssub.s32 32, 32
      %907 = vsyncadd [#allocation3], %s906
      %s909 = sshll.u32 [#allocation2], 4
      %s910 = int_to_ptr.vmem [resolvable:$true] %s909
      %912 = dma.vmem_to_hbm [thread:$0]  %s910, 32, %s7, [#allocation3]
    $region33: #{encoder_forward.1} parent=1 // pred_fallthru
      _
    // Predicated region
    $region34: #{encoder_forward.1} parent=1 // pred_check
      _
    $region35: #{encoder_forward.1} parent=1 // pred_check_branch
      %914 = sbr.rel (0) target = $region37
    $region36: #{encoder_forward.1} parent=1 // pred_region
      _
    $region37: #{encoder_forward.1} parent=1 // pred_fallthru
      _
    // Predicated region
    $region38: #{encoder_forward.1} parent=1 // pred_check
      _
    $region39: #{encoder_forward.1} parent=1 // pred_check_branch
      %916 = sbr.rel (0) target = $region41
    $region40: #{encoder_forward.1} parent=1 // pred_region
      %917 = dma.done [#allocation3], 32
    $region41: #{encoder_forward.1} parent=1 // pred_fallthru
      _
    %918 = vsyncpa [#allocation3], 1

</llo_original>
